<compile_context>
chip_gen: v7x
topology: tpu7x:2x2x1
jax: 0.10.0
libtpu: 0.0.40
codegen_flags: <defaults>
</compile_context>

<pallas_src>
import functools

import jax
import jax.numpy as jnp
from jax.experimental import pallas as pl
from jax.experimental.pallas import tpu as pltpu


def _fused_kernel(x1_ref, x2_ref, w1_ref, w2_ref, b1_ref, b2_ref,
                  o1_ref, o2_ref, *, use_sigmoid: bool):
    """Both AE branches for one batch tile: linear -> act -> row L2 normalize.

    Refs: x (tb, Din), w (Din, Dh), b (1, Dh), o (tb, Dh).
    """
    eps_sq = 1e-24  # (1e-12)^2, matches torch.F.normalize eps

    def branch(x_ref, w_ref, b_ref, o_ref):
        # MXU matmul with f32 accumulation, then bias (broadcast over rows).
        z = jnp.dot(x_ref[...], w_ref[...], preferred_element_type=jnp.float32)
        z = z + b_ref[...]
        if use_sigmoid:
            z = jax.nn.sigmoid(z)          # EUP path (exp + reciprocal)
        # F.normalize(z, dim=1, p=2) == z / max(||z||, eps)
        #                            == z * rsqrt(max(||z||^2, eps^2))
        sq_sum = jnp.sum(z * z, axis=1, keepdims=True)      # XLU reduce
        inv_norm = jax.lax.rsqrt(jnp.maximum(sq_sum, eps_sq))  # EUP
        o_ref[...] = (z * inv_norm).astype(o_ref.dtype)

    branch(x1_ref, w1_ref, b1_ref, o1_ref)
    branch(x2_ref, w2_ref, b2_ref, o2_ref)


def fused_model_forward(x1, x2, params, *, act: str = "sigmoid",
                        batch_tile: int = 512):
    """Pallas TPU equivalent of model_.forward (both AE branches in one call)."""
    assert act in ("ident", "sigmoid")
    B, Din = x1.shape
    assert x2.shape == (B, Din)
    Din_w, Dh = params["w1"].shape
    assert Din_w == Din and params["w2"].shape == (Din, Dh)

    # Biases as (1, Dh) so the kernel sees a lane-dense 2-D tile (free reshape).
    b1 = params["b1"].reshape(1, Dh)
    b2 = params["b2"].reshape(1, Dh)

    # Batch tiling: only tile when B is large and divides evenly; otherwise one
    # full-batch block (always legal since it equals the full array dims).
    if B > batch_tile and B % batch_tile == 0:
        tb = batch_tile
    else:
        tb = B
    grid = (B // tb,)

    kernel = functools.partial(_fused_kernel, use_sigmoid=(act == "sigmoid"))

    z1, z2 = pl.pallas_call(
        kernel,
        out_shape=(jax.ShapeDtypeStruct((B, Dh), jnp.float32),
                   jax.ShapeDtypeStruct((B, Dh), jnp.float32)),
        grid_spec=pltpu.PrefetchScalarGridSpec(
            num_scalar_prefetch=0,
            grid=grid,
            in_specs=[
                pl.BlockSpec((tb, Din), lambda i: (i, 0)),   # x1 tile
                pl.BlockSpec((tb, Din), lambda i: (i, 0)),   # x2 tile
                pl.BlockSpec((Din, Dh), lambda i: (0, 0)),   # w1 (grid-invariant)
                pl.BlockSpec((Din, Dh), lambda i: (0, 0)),   # w2 (grid-invariant)
                pl.BlockSpec((1, Dh), lambda i: (0, 0)),     # b1 (grid-invariant)
                pl.BlockSpec((1, Dh), lambda i: (0, 0)),     # b2 (grid-invariant)
            ],
            out_specs=[
                pl.BlockSpec((tb, Dh), lambda i: (i, 0)),
                pl.BlockSpec((tb, Dh), lambda i: (i, 0)),
            ],
        ),
        compiler_params=pltpu.CompilerParams(
            # Batch tiles are independent; lets v7x megacore shard them.
            dimension_semantics=("parallel",),
        ),
    )(x1, x2, params["w1"], params["w2"], b1, b2)

    return z1, z2


def init_params(key, input_dim, hidden_dim):
    """Deterministic init mimicking torch.nn.Linear's U(-1/sqrt(in), 1/sqrt(in)).

    Weights stored pre-transposed as (input_dim, hidden_dim) so the kernel can
    do x @ W directly.
    """
    k1, k2, k3, k4 = jax.random.split(key, 4)
    bound = 1.0 / (input_dim ** 0.5)
    return {
        "w1": jax.random.uniform(k1, (input_dim, hidden_dim), jnp.float32,
                                 -bound, bound),
        "b1": jax.random.uniform(k2, (hidden_dim,), jnp.float32, -bound, bound),
        "w2": jax.random.uniform(k3, (input_dim, hidden_dim), jnp.float32,
                                 -bound, bound),
        "b2": jax.random.uniform(k4, (hidden_dim,), jnp.float32, -bound, bound),
    }


if __name__ == "__main__":
    batch = 8
    input_dim = 32
    hidden_dim = 128
    act = "sigmoid"

    key = jax.random.PRNGKey(0)
    kp, kx1, kx2 = jax.random.split(key, 3)

    params = init_params(kp, input_dim, hidden_dim)
    x1 = jax.random.normal(kx1, (batch, input_dim), jnp.float32)
    x2 = jax.random.normal(kx2, (batch, input_dim), jnp.float32)

    z1, z2 = fused_model_forward(x1, x2, params, act=act)
    jax.block_until_ready((z1, z2))

    # Pure-JAX reference check (mirrors torch: sqrt + clamp + divide).
    def ref_branch(x, w, b):
        z = x @ w + b
        z = jax.nn.sigmoid(z) if act == "sigmoid" else z
        n = jnp.linalg.norm(z, axis=1, keepdims=True)
        return z / jnp.maximum(n, 1e-12)

    r1 = ref_branch(x1, params["w1"], params["b1"])
    r2 = ref_branch(x2, params["w2"], params["b2"])
    # Slightly relaxed tolerance: kernel uses rsqrt+mul instead of sqrt+div.
    assert jnp.allclose(z1, r1, atol=1e-4, rtol=1e-4)
    assert jnp.allclose(z2, r2, atol=1e-4, rtol=1e-4)

    print("KERNEL_OK")
</pallas_src>

<mosaic_0001>
module attributes {stable_mosaic.version = 11 : i64} {
  func.func @_fused_kernel(%arg0: i32, %arg1: memref<8x32xf32, #tpu.memory_space<vmem>>, %arg2: memref<8x32xf32, #tpu.memory_space<vmem>>, %arg3: memref<32x128xf32, #tpu.memory_space<vmem>>, %arg4: memref<32x128xf32, #tpu.memory_space<vmem>>, %arg5: memref<1x128xf32, #tpu.memory_space<vmem>>, %arg6: memref<1x128xf32, #tpu.memory_space<vmem>>, %arg7: memref<8x128xf32, #tpu.memory_space<vmem>>, %arg8: memref<8x128xf32, #tpu.memory_space<vmem>>) attributes {dimension_semantics = [#tpu.dimension_semantics<parallel>], iteration_bounds = array<i64: 1>, scalar_prefetch = 0 : i64, scratch_operands = 0 : i64, tpu.core_type = #tpu.core_type<tc>, window_params = [{transform_indices = @transform_0, window_bounds = array<i64: 8, 32>}, {transform_indices = @transform_1, window_bounds = array<i64: 8, 32>}, {pipeline_mode = #tpu.pipeline_mode<synchronous>, transform_indices = @transform_2, window_bounds = array<i64: 32, 128>}, {pipeline_mode = #tpu.pipeline_mode<synchronous>, transform_indices = @transform_3, window_bounds = array<i64: 32, 128>}, {pipeline_mode = #tpu.pipeline_mode<synchronous>, transform_indices = @transform_4, window_bounds = array<i64: 1, 128>}, {pipeline_mode = #tpu.pipeline_mode<synchronous>, transform_indices = @transform_5, window_bounds = array<i64: 1, 128>}, {transform_indices = @transform_6, window_bounds = array<i64: 8, 128>}, {transform_indices = @transform_7, window_bounds = array<i64: 8, 128>}]} {
    %c0 = arith.constant 0 : index
    %c0_0 = arith.constant 0 : index
    %0 = vector.load %arg1[%c0, %c0_0] : memref<8x32xf32, #tpu.memory_space<vmem>>, vector<8x32xf32>
    %c0_1 = arith.constant 0 : index
    %c0_2 = arith.constant 0 : index
    %1 = vector.load %arg3[%c0_1, %c0_2] : memref<32x128xf32, #tpu.memory_space<vmem>>, vector<32x128xf32>
    %cst = arith.constant dense<0.000000e+00> : vector<8x128xf32>
    %2 = tpu.matmul %0, %1, %cst {dimension_numbers = #tpu.dot_dimension_numbers<[1], [0], [0], [1], [0, 0, 1, 1], [], []>} : vector<8x32xf32>, vector<32x128xf32>, vector<8x128xf32> -> vector<8x128xf32>
    %c0_3 = arith.constant 0 : index
    %c0_4 = arith.constant 0 : index
    %3 = vector.load %arg5[%c0_3, %c0_4] : memref<1x128xf32, #tpu.memory_space<vmem>>, vector<1x128xf32>
    %4 = vector.broadcast %3 : vector<1x128xf32> to vector<8x128xf32>
    %5 = arith.addf %2, %4 : vector<8x128xf32>
    %6 = arith.negf %5 : vector<8x128xf32>
    %7 = math.exp %6 : vector<8x128xf32>
    %cst_5 = arith.constant 1.000000e+00 : f32
    %8 = vector.broadcast %cst_5 : f32 to vector<8x128xf32>
    %9 = arith.addf %8, %7 : vector<8x128xf32>
    %10 = arith.divf %8, %9 : vector<8x128xf32>
    %11 = arith.mulf %10, %10 : vector<8x128xf32>
    %cst_6 = arith.constant dense<0.000000e+00> : vector<8xf32>
    %12 = vector.multi_reduction <add>, %11, %cst_6 [1] : vector<8x128xf32> to vector<8xf32>
    %13 = vector.shape_cast %12 : vector<8xf32> to vector<8x1xf32>
    %cst_7 = arith.constant 1.000000e-24 : f32
    %14 = vector.broadcast %cst_7 : f32 to vector<8x1xf32>
    %15 = arith.maximumf %13, %14 : vector<8x1xf32>
    %16 = math.rsqrt %15 : vector<8x1xf32>
    %17 = vector.broadcast %16 : vector<8x1xf32> to vector<8x128xf32>
    %18 = arith.mulf %10, %17 : vector<8x128xf32>
    %c0_8 = arith.constant 0 : index
    %c0_9 = arith.constant 0 : index
    %19 = vector.load %arg7[%c0_8, %c0_9] : memref<8x128xf32, #tpu.memory_space<vmem>>, vector<8x128xf32>
    tpu.vector_store %arg7[%c0_8, %c0_9], %18 {strides = array<i32>} : memref<8x128xf32, #tpu.memory_space<vmem>>, vector<8x128xf32>,
    %c0_10 = arith.constant 0 : index
    %c0_11 = arith.constant 0 : index
    %20 = vector.load %arg2[%c0_10, %c0_11] : memref<8x32xf32, #tpu.memory_space<vmem>>, vector<8x32xf32>
    %c0_12 = arith.constant 0 : index
    %c0_13 = arith.constant 0 : index
    %21 = vector.load %arg4[%c0_12, %c0_13] : memref<32x128xf32, #tpu.memory_space<vmem>>, vector<32x128xf32>
    %cst_14 = arith.constant dense<0.000000e+00> : vector<8x128xf32>
    %22 = tpu.matmul %20, %21, %cst_14 {dimension_numbers = #tpu.dot_dimension_numbers<[1], [0], [0], [1], [0, 0, 1, 1], [], []>} : vector<8x32xf32>, vector<32x128xf32>, vector<8x128xf32> -> vector<8x128xf32>
    %c0_15 = arith.constant 0 : index
    %c0_16 = arith.constant 0 : index
    %23 = vector.load %arg6[%c0_15, %c0_16] : memref<1x128xf32, #tpu.memory_space<vmem>>, vector<1x128xf32>
    %24 = vector.broadcast %23 : vector<1x128xf32> to vector<8x128xf32>
    %25 = arith.addf %22, %24 : vector<8x128xf32>
    %26 = arith.negf %25 : vector<8x128xf32>
    %27 = math.exp %26 : vector<8x128xf32>
    %cst_17 = arith.constant 1.000000e+00 : f32
    %28 = vector.broadcast %cst_17 : f32 to vector<8x128xf32>
    %29 = arith.addf %28, %27 : vector<8x128xf32>
    %30 = arith.divf %28, %29 : vector<8x128xf32>
    %31 = arith.mulf %30, %30 : vector<8x128xf32>
    %cst_18 = arith.constant dense<0.000000e+00> : vector<8xf32>
    %32 = vector.multi_reduction <add>, %31, %cst_18 [1] : vector<8x128xf32> to vector<8xf32>
    %33 = vector.shape_cast %32 : vector<8xf32> to vector<8x1xf32>
    %cst_19 = arith.constant 1.000000e-24 : f32
    %34 = vector.broadcast %cst_19 : f32 to vector<8x1xf32>
    %35 = arith.maximumf %33, %34 : vector<8x1xf32>
    %36 = math.rsqrt %35 : vector<8x1xf32>
    %37 = vector.broadcast %36 : vector<8x1xf32> to vector<8x128xf32>
    %38 = arith.mulf %30, %37 : vector<8x128xf32>
    %c0_20 = arith.constant 0 : index
    %c0_21 = arith.constant 0 : index
    %39 = vector.load %arg8[%c0_20, %c0_21] : memref<8x128xf32, #tpu.memory_space<vmem>>, vector<8x128xf32>
    tpu.vector_store %arg8[%c0_20, %c0_21], %38 {strides = array<i32>} : memref<8x128xf32, #tpu.memory_space<vmem>>, vector<8x128xf32>,
    return
  }
  func.func @transform_0(%arg0: i32) -> (i32, i32) {
    %c0_i32 = arith.constant 0 : i32
    %c0_i32_0 = arith.constant 0 : i32
    return %arg0, %c0_i32 : i32, i32
  }
  func.func @transform_1(%arg0: i32) -> (i32, i32) {
    %c0_i32 = arith.constant 0 : i32
    %c0_i32_0 = arith.constant 0 : i32
    return %arg0, %c0_i32 : i32, i32
  }
  func.func @transform_2(%arg0: i32) -> (i32, i32) {
    %c0_i32 = arith.constant 0 : i32
    %c0_i32_0 = arith.constant 0 : i32
    %c0_i32_1 = arith.constant 0 : i32
    return %c0_i32, %c0_i32_0 : i32, i32
  }
  func.func @transform_3(%arg0: i32) -> (i32, i32) {
    %c0_i32 = arith.constant 0 : i32
    %c0_i32_0 = arith.constant 0 : i32
    %c0_i32_1 = arith.constant 0 : i32
    return %c0_i32, %c0_i32_0 : i32, i32
  }
  func.func @transform_4(%arg0: i32) -> (i32, i32) {
    %c0_i32 = arith.constant 0 : i32
    %c0_i32_0 = arith.constant 0 : i32
    %c0_i32_1 = arith.constant 0 : i32
    return %c0_i32, %c0_i32_0 : i32, i32
  }
  func.func @transform_5(%arg0: i32) -> (i32, i32) {
    %c0_i32 = arith.constant 0 : i32
    %c0_i32_0 = arith.constant 0 : i32
    %c0_i32_1 = arith.constant 0 : i32
    return %c0_i32, %c0_i32_0 : i32, i32
  }
  func.func @transform_6(%arg0: i32) -> (i32, i32) {
    %c0_i32 = arith.constant 0 : i32
    %c0_i32_0 = arith.constant 0 : i32
    return %arg0, %c0_i32 : i32, i32
  }
  func.func @transform_7(%arg0: i32) -> (i32, i32) {
    %c0_i32 = arith.constant 0 : i32
    %c0_i32_0 = arith.constant 0 : i32
    return %arg0, %c0_i32 : i32, i32
  }
}

</mosaic_0001>

<llo_original>
// kernel: tpu_custom_call.1
$region0: #{tpu_custom_call.1}
  #allocation0 [shape = 'u32[]', space=smem, size = 0x4, offset = 0x4, fixed_abs, tag = 'smem constant byte address 0x4 - core index']
  #allocation1 [shape = 'u32[144,128]{1,0:T(1,128)}', space=vmem, size = 0x12000, scoped, tag = 'internal scratch']
  %s0 = inlined_call_operand.hbm [shape: f32[8,32], index: 0, kind: input, shape index: {}]
  %s1 = inlined_call_operand.hbm [shape: f32[8,32], index: 1, kind: input, shape index: {}]
  %s2 = inlined_call_operand.hbm [shape: f32[32,128], index: 2, kind: input, shape index: {}]
  %s3 = inlined_call_operand.hbm [shape: f32[32,128], index: 3, kind: input, shape index: {}]
  %s4 = inlined_call_operand.vmem [shape: f32[1,128], index: 4, kind: input, shape index: {}]
  %s5 = inlined_call_operand.vmem [shape: f32[1,128], index: 5, kind: input, shape index: {}]
  %s6 = inlined_call_operand.hbm [shape: f32[8,128], index: 6, kind: output, shape index: {0}]
  %s7 = inlined_call_operand.hbm [shape: f32[8,128], index: 7, kind: output, shape index: {1}]
  %8 = xla_tuple %s6, %s7
  %s9 = sld [smem:[#allocation0]]
  $region58: #{tpu_custom_call.1} parent=0
    _
  %s11 = ssub.s32 1, %s9
  %s12 = scalar_select 0, %s11, %s9
  $region1: #{tpu_custom_call.1} parent=0
    #allocation2 [shape = 'u8[4096]{0}', space=vmem, size = 0x1000, scoped, tag = 'input window, operand 0, single buffered']
    #allocation3 [shape = 's32[1]{0}', space=sflag, size = 0x4, scoped, tag = 'scoped memory for tpu_custom_call.1']
    #allocation4 [shape = 's32[1]{0}', space=sflag, size = 0x4, scoped, tag = 'scoped memory for tpu_custom_call.1']
    #allocation5 [shape = 'u8[4096]{0}', space=vmem, size = 0x1000, scoped, tag = 'input window, operand 1, single buffered']
    #allocation6 [shape = 's32[1]{0}', space=sflag, size = 0x4, scoped, tag = 'scoped memory for tpu_custom_call.1']
    #allocation7 [shape = 'u8[16384]{0}', space=vmem, size = 0x4000, scoped, tag = 'input window, operand 2, single buffered']
    #allocation8 [shape = 'u8[16384]{0}', space=vmem, size = 0x4000, scoped, tag = 'input window, operand 3, single buffered']
    #allocation9 [shape = 's32[1]{0}', space=sflag, size = 0x4, scoped, tag = 'scoped memory for tpu_custom_call.1']
    #allocation10 [shape = 'u8[4096]{0}', space=vmem, size = 0x1000, scoped, tag = 'output window, operand 0, single buffered']
    #allocation11 [shape = 'u8[4096]{0}', space=vmem, size = 0x1000, scoped, tag = 'output window, operand 1, single buffered']
    #allocation12 [shape = 's32[1]{0}', space=sflag, size = 0x4, scoped, tag = 'scoped memory for tpu_custom_call.1']
    %13 = vsyncpa [#allocation3], 0
    %14 = vsyncpa [#allocation6], 0
    %15 = vsyncpa [#allocation9], 0
    %16 = vsyncpa [#allocation4], 0
    %17 = vsyncpa [#allocation12], 0
    // Predicated region
    $region2: #{tpu_custom_call.1} parent=1 // pred_check
      _
    $region3: #{tpu_custom_call.1} parent=1 // pred_check_branch
      %19 = sbr.rel (0) target = $region5
    $region4: #{tpu_custom_call.1} parent=1 // pred_region
      %s21 = ssub.s32 128, 128
      %22 = vsyncadd [#allocation3], %s21
      %s24 = sshll.u32 [#allocation2], 4
      %s25 = int_to_ptr.vmem [resolvable:$true] %s24
      %27 = dma.hbm_to_vmem [thread:$0]  %s0, 128, %s25, [#allocation3]
    $region5: #{tpu_custom_call.1} parent=1 // pred_fallthru
      _
    // Predicated region
    $region6: #{tpu_custom_call.1} parent=1 // pred_check
      _
    $region7: #{tpu_custom_call.1} parent=1 // pred_check_branch
      %29 = sbr.rel (0) target = $region9
    $region8: #{tpu_custom_call.1} parent=1 // pred_region
      %s31 = ssub.s32 128, 128
      %32 = vsyncadd [#allocation6], %s31
      %s34 = sshll.u32 [#allocation5], 4
      %s35 = int_to_ptr.vmem [resolvable:$true] %s34
      %37 = dma.hbm_to_vmem [thread:$0]  %s1, 128, %s35, [#allocation6]
    $region9: #{tpu_custom_call.1} parent=1 // pred_fallthru
      _
    // Predicated region
    $region10: #{tpu_custom_call.1} parent=1 // pred_check
      _
    $region11: #{tpu_custom_call.1} parent=1 // pred_check_branch
      %39 = sbr.rel (0) target = $region13
    $region12: #{tpu_custom_call.1} parent=1 // pred_region
      %s41 = ssub.s32 512, 512
      %42 = vsyncadd [#allocation6], %s41
      %s43 = sshll.u32 [#allocation7], 4
      %s44 = int_to_ptr.vmem [resolvable:$true] %s43
      %49 = dma.hbm_to_vmem [thread:$0]  %s2, 512, %s44, [#allocation6], 128, 128, 8
    $region13: #{tpu_custom_call.1} parent=1 // pred_fallthru
      _
    // Predicated region
    $region14: #{tpu_custom_call.1} parent=1 // pred_check
      _
    $region15: #{tpu_custom_call.1} parent=1 // pred_check_branch
      %51 = sbr.rel (0) target = $region17
    $region16: #{tpu_custom_call.1} parent=1 // pred_region
      %s53 = ssub.s32 512, 512
      %54 = vsyncadd [#allocation9], %s53
      %s55 = sshll.u32 [#allocation8], 4
      %s56 = int_to_ptr.vmem [resolvable:$true] %s55
      %61 = dma.hbm_to_vmem [thread:$0]  %s3, 512, %s56, [#allocation9], 128, 128, 8
    $region17: #{tpu_custom_call.1} parent=1 // pred_fallthru
      _
    // Predicated region
    $region18: #{tpu_custom_call.1} parent=1 // pred_check
      _
    $region19: #{tpu_custom_call.1} parent=1 // pred_check_branch
      %63 = sbr.rel (0) target = $region21
    $region20: #{tpu_custom_call.1} parent=1 // pred_region
      _
    $region21: #{tpu_custom_call.1} parent=1 // pred_fallthru
      _
    // Predicated region
    $region22: #{tpu_custom_call.1} parent=1 // pred_check
      _
    $region23: #{tpu_custom_call.1} parent=1 // pred_check_branch
      %65 = sbr.rel (0) target = $region25
    $region24: #{tpu_custom_call.1} parent=1 // pred_region
      _
    $region25: #{tpu_custom_call.1} parent=1 // pred_fallthru
      _
    // Predicated region
    $region26: #{tpu_custom_call.1} parent=1 // pred_check
      _
    $region27: #{tpu_custom_call.1} parent=1 // pred_check_branch
      %67 = sbr.rel (0) target = $region29
    $region28: #{tpu_custom_call.1} parent=1 // pred_region
      %68 = dma.done [#allocation3], 128
    $region29: #{tpu_custom_call.1} parent=1 // pred_fallthru
      _
    // Predicated region
    $region30: #{tpu_custom_call.1} parent=1 // pred_check
      _
    $region31: #{tpu_custom_call.1} parent=1 // pred_check_branch
      %70 = sbr.rel (0) target = $region33
    $region32: #{tpu_custom_call.1} parent=1 // pred_region
      %71 = dma.done [#allocation6], 128
    $region33: #{tpu_custom_call.1} parent=1 // pred_fallthru
      _
    // Predicated region
    $region34: #{tpu_custom_call.1} parent=1 // pred_check
      _
    $region35: #{tpu_custom_call.1} parent=1 // pred_check_branch
      %73 = sbr.rel (0) target = $region37
    $region36: #{tpu_custom_call.1} parent=1 // pred_region
      %74 = dma.done [#allocation6], 512
    $region37: #{tpu_custom_call.1} parent=1 // pred_fallthru
      _
    // Predicated region
    $region38: #{tpu_custom_call.1} parent=1 // pred_check
      _
    $region39: #{tpu_custom_call.1} parent=1 // pred_check_branch
      %76 = sbr.rel (0) target = $region41
    $region40: #{tpu_custom_call.1} parent=1 // pred_region
      %77 = dma.done [#allocation9], 512
    $region41: #{tpu_custom_call.1} parent=1 // pred_fallthru
      _
    %v78 = vld [vmem:[#allocation2] sm:$0xff]
    %v79 = vld [vmem:[#allocation7] sm:$0xff]
    %v80 = vld [vmem:[#allocation7 + $0x8] sm:$0xff]
    %v81 = vld [vmem:[#allocation7 + $0x10] sm:$0xff]
    %v82 = vld [vmem:[#allocation7 + $0x18] sm:$0xff]
    %v83 = vld [vmem:[%s4] sm:$0x1]
    %v85 = vlaneseq
    %v86 = vshrl.u32 %v85, 7
    %v87 = vsub.s32 0, %v86
    %v88 = vrot.slane %v83, %v87
    %vm90 = vcmask 261120
    %v92 = vsel %vm90, %v78, 0
    %94 = vmatprep.subr.mxu0 0.0
    %95 = vmatpush1.msra.mxu0 %v79
    %96 = vmatprep.subr.mxu0 0.0
    %97 = vmatpush1.msra.mxu0 %v80
    %98 = vmatprep.subr.mxu0 0.0
    %99 = vmatpush1.msra.mxu0 %v81
    %100 = vmatprep.subr.mxu0 0.0
    %101 = vmatpush1.msra.mxu0 %v82
    %102 = vmatprep.subr.mxu0 0.0
    %103 = vmatpush1.msra.mxu0 0.0
    %104 = vmatprep.subr.mxu0 0.0
    %105 = vmatpush1.msra.mxu0 0.0
    %106 = vmatprep.subr.mxu0 0.0
    %107 = vmatpush1.msra.mxu0 0.0
    %108 = vmatprep.subr.mxu0 0.0
    %109 = vmatpush1.msra.mxu0 0.0
    %110 = vmatprep.subr.mxu0 0.0
    %111 = vmatpush1.msra.mxu0 0.0
    %112 = vmatprep.subr.mxu0 0.0
    %113 = vmatpush1.msra.mxu0 0.0
    %114 = vmatprep.subr.mxu0 0.0
    %115 = vmatpush1.msra.mxu0 0.0
    %116 = vmatprep.subr.mxu0 0.0
    %117 = vmatpush1.msra.mxu0 0.0
    %118 = vmatprep.subr.mxu0 0.0
    %119 = vmatpush1.msra.mxu0 0.0
    %120 = vmatprep.subr.mxu0 0.0
    %121 = vmatpush1.msra.mxu0 0.0
    %122 = vmatprep.subr.mxu0 0.0
    %123 = vmatpush1.msra.mxu0 0.0
    %124 = vmatprep.subr.mxu0 0.0
    %125 = vmatpush1.msra.mxu0 0.0
    %126 = vmatprep.subr.mxu0 0.0
    %127 = vmatpush1.msra.mxu0 0.0
    %128 = vmatprep.subr.mxu0 0.0
    %129 = vmatpush1.msra.mxu0 0.0
    %130 = vmatprep.subr.mxu0 0.0
    %131 = vmatpush1.msra.mxu0 0.0
    %132 = vmatprep.subr.mxu0 0.0
    %133 = vmatpush1.msra.mxu0 0.0
    %134 = vmatprep.subr.mxu0 0.0
    %135 = vmatpush1.msra.mxu0 0.0
    %136 = vmatprep.subr.mxu0 0.0
    %137 = vmatpush1.msra.mxu0 0.0
    %138 = vmatprep.subr.mxu0 0.0
    %139 = vmatpush1.msra.mxu0 0.0
    %140 = vmatprep.subr.mxu0 0.0
    %141 = vmatpush1.msra.mxu0 0.0
    %142 = vmatprep.subr.mxu0 0.0
    %143 = vmatpush1.msra.mxu0 0.0
    %144 = vmatprep.subr.mxu0 0.0
    %145 = vmatpush1.msra.mxu0 0.0
    %146 = vmatprep.subr.mxu0 0.0
    %147 = vmatpush1.msra.mxu0 0.0
    %148 = vmatprep.subr.mxu0 0.0
    %149 = vmatpush1.msra.mxu0 0.0
    %150 = vmatprep.subr.mxu0 0.0
    %151 = vmatpush1.msra.mxu0 0.0
    %152 = vmatprep.subr.mxu0 0.0
    %153 = vmatpush1.msra.mxu0 0.0
    %154 = vmatprep.subr.mxu0 0.0
    %155 = vmatpush1.msra.mxu0 0.0
    %156 = vmatprep.subr.mxu0 0.0
    %157 = vmatpush1.msra.mxu0 0.0
    %158 = vmatprep.mubr.f32.mxu0 0.0
    %159 = vmatmul.mubr.f32.gmra.mrb[0].mxu0 %v92
    %v160 = vpop.f32.mrb[0].mxu0
    %v161 = vadd.f32 %v88, %v160
    %v162 = vpop.f32.mrb[0].mxu0
    %163 = vdwg.mxu0
    %v164 = vxor.u32 %v161, 2147483648
    %v165 = vmul.f32 %v164, 1.442695
    %v166 = vpow.pop %v165
    %v167 = vadd.f32 %v166, 1.0
    %v168 = vrcp.pop %v167
    %v169 = vmul.f32 1.0, %v168
    %v170 = vmul.f32 %v169, %v169
    %171 = vadd.xlane.f32.xlu0 %v170
    %v172 = vpop.xlane.xlu0 %171
    %v173 = vmax.f32 %v172, 1e-24
    %v174 = vrsqrt.pop %v173
    %v175 = vmul.f32 %v169, %v174
    %176 = vst [vmem:[#allocation10] sm:$0xff] %v175
    %v177 = vld [vmem:[#allocation5] sm:$0xff]
    %v178 = vld [vmem:[#allocation8] sm:$0xff]
    %v179 = vld [vmem:[#allocation8 + $0x8] sm:$0xff]
    %v180 = vld [vmem:[#allocation8 + $0x10] sm:$0xff]
    %v181 = vld [vmem:[#allocation8 + $0x18] sm:$0xff]
    %v182 = vld [vmem:[%s5] sm:$0x1]
    %v184 = vlaneseq
    %v185 = vshrl.u32 %v184, 7
    %v186 = vsub.s32 0, %v185
    %v187 = vrot.slane %v182, %v186
    %v190 = vsel %vm90, %v177, 0
    %192 = vmatprep.subr.mxu0 0.0
    %193 = vmatpush1.msra.mxu0 %v178
    %194 = vmatprep.subr.mxu0 0.0
    %195 = vmatpush1.msra.mxu0 %v179
    %196 = vmatprep.subr.mxu0 0.0
    %197 = vmatpush1.msra.mxu0 %v180
    %198 = vmatprep.subr.mxu0 0.0
    %199 = vmatpush1.msra.mxu0 %v181
    %200 = vmatprep.subr.mxu0 0.0
    %201 = vmatpush1.msra.mxu0 0.0
    %202 = vmatprep.subr.mxu0 0.0
    %203 = vmatpush1.msra.mxu0 0.0
    %204 = vmatprep.subr.mxu0 0.0
    %205 = vmatpush1.msra.mxu0 0.0
    %206 = vmatprep.subr.mxu0 0.0
    %207 = vmatpush1.msra.mxu0 0.0
    %208 = vmatprep.subr.mxu0 0.0
    %209 = vmatpush1.msra.mxu0 0.0
    %210 = vmatprep.subr.mxu0 0.0
    %211 = vmatpush1.msra.mxu0 0.0
    %212 = vmatprep.subr.mxu0 0.0
    %213 = vmatpush1.msra.mxu0 0.0
    %214 = vmatprep.subr.mxu0 0.0
    %215 = vmatpush1.msra.mxu0 0.0
    %216 = vmatprep.subr.mxu0 0.0
    %217 = vmatpush1.msra.mxu0 0.0
    %218 = vmatprep.subr.mxu0 0.0
    %219 = vmatpush1.msra.mxu0 0.0
    %220 = vmatprep.subr.mxu0 0.0
    %221 = vmatpush1.msra.mxu0 0.0
    %222 = vmatprep.subr.mxu0 0.0
    %223 = vmatpush1.msra.mxu0 0.0
    %224 = vmatprep.subr.mxu0 0.0
    %225 = vmatpush1.msra.mxu0 0.0
    %226 = vmatprep.subr.mxu0 0.0
    %227 = vmatpush1.msra.mxu0 0.0
    %228 = vmatprep.subr.mxu0 0.0
    %229 = vmatpush1.msra.mxu0 0.0
    %230 = vmatprep.subr.mxu0 0.0
    %231 = vmatpush1.msra.mxu0 0.0
    %232 = vmatprep.subr.mxu0 0.0
    %233 = vmatpush1.msra.mxu0 0.0
    %234 = vmatprep.subr.mxu0 0.0
    %235 = vmatpush1.msra.mxu0 0.0
    %236 = vmatprep.subr.mxu0 0.0
    %237 = vmatpush1.msra.mxu0 0.0
    %238 = vmatprep.subr.mxu0 0.0
    %239 = vmatpush1.msra.mxu0 0.0
    %240 = vmatprep.subr.mxu0 0.0
    %241 = vmatpush1.msra.mxu0 0.0
    %242 = vmatprep.subr.mxu0 0.0
    %243 = vmatpush1.msra.mxu0 0.0
    %244 = vmatprep.subr.mxu0 0.0
    %245 = vmatpush1.msra.mxu0 0.0
    %246 = vmatprep.subr.mxu0 0.0
    %247 = vmatpush1.msra.mxu0 0.0
    %248 = vmatprep.subr.mxu0 0.0
    %249 = vmatpush1.msra.mxu0 0.0
    %250 = vmatprep.subr.mxu0 0.0
    %251 = vmatpush1.msra.mxu0 0.0
    %252 = vmatprep.subr.mxu0 0.0
    %253 = vmatpush1.msra.mxu0 0.0
    %254 = vmatprep.subr.mxu0 0.0
    %255 = vmatpush1.msra.mxu0 0.0
    %256 = vmatprep.mubr.f32.mxu0 0.0
    %257 = vmatmul.mubr.f32.gmra.mrb[0].mxu0 %v190
    %v258 = vpop.f32.mrb[0].mxu0
    %v259 = vadd.f32 %v187, %v258
    %v260 = vpop.f32.mrb[0].mxu0
    %261 = vdwg.mxu0
    %v262 = vxor.u32 %v259, 2147483648
    %v263 = vmul.f32 %v262, 1.442695
    %v264 = vpow.pop %v263
    %v265 = vadd.f32 %v264, 1.0
    %v266 = vrcp.pop %v265
    %v267 = vmul.f32 1.0, %v266
    %v268 = vmul.f32 %v267, %v267
    %269 = vadd.xlane.f32.xlu0 %v268
    %v270 = vpop.xlane.xlu0 %269
    %v271 = vmax.f32 %v270, 1e-24
    %v272 = vrsqrt.pop %v271
    %v273 = vmul.f32 %v267, %v272
    %274 = vst [vmem:[#allocation11] sm:$0xff] %v273
    // Predicated region
    $region42: #{tpu_custom_call.1} parent=1 // pred_check
      _
    $region43: #{tpu_custom_call.1} parent=1 // pred_check_branch
      %276 = sbr.rel (0) target = $region45
    $region44: #{tpu_custom_call.1} parent=1 // pred_region
      %s278 = ssub.s32 128, 128
      %279 = vsyncadd [#allocation4], %s278
      %s281 = sshll.u32 [#allocation10], 4
      %s282 = int_to_ptr.vmem [resolvable:$true] %s281
      %284 = dma.vmem_to_hbm [thread:$0]  %s282, 128, %s6, [#allocation4]
    $region45: #{tpu_custom_call.1} parent=1 // pred_fallthru
      _
    // Predicated region
    $region46: #{tpu_custom_call.1} parent=1 // pred_check
      _
    $region47: #{tpu_custom_call.1} parent=1 // pred_check_branch
      %286 = sbr.rel (0) target = $region49
    $region48: #{tpu_custom_call.1} parent=1 // pred_region
      %s288 = ssub.s32 128, 128
      %289 = vsyncadd [#allocation12], %s288
      %s291 = sshll.u32 [#allocation11], 4
      %s292 = int_to_ptr.vmem [resolvable:$true] %s291
      %294 = dma.vmem_to_hbm [thread:$0]  %s292, 128, %s7, [#allocation12]
    $region49: #{tpu_custom_call.1} parent=1 // pred_fallthru
      _
    // Predicated region
    $region50: #{tpu_custom_call.1} parent=1 // pred_check
      _
    $region51: #{tpu_custom_call.1} parent=1 // pred_check_branch
      %296 = sbr.rel (0) target = $region53
    $region52: #{tpu_custom_call.1} parent=1 // pred_region
      %297 = dma.done [#allocation4], 128
    $region53: #{tpu_custom_call.1} parent=1 // pred_fallthru
      _
    // Predicated region
    $region54: #{tpu_custom_call.1} parent=1 // pred_check
      _
    $region55: #{tpu_custom_call.1} parent=1 // pred_check_branch
      %299 = sbr.rel (0) target = $region57
    $region56: #{tpu_custom_call.1} parent=1 // pred_region
      %300 = dma.done [#allocation12], 128
    $region57: #{tpu_custom_call.1} parent=1 // pred_fallthru
      _
    %301 = vsyncpa [#allocation3], 1
    %302 = vsyncpa [#allocation6], 1
    %303 = vsyncpa [#allocation9], 1
    %304 = vsyncpa [#allocation4], 1
    %305 = vsyncpa [#allocation12], 1

</llo_original>
